<compile_context>
chip_gen: v5e
topology: v5e:2x2
jax: 0.10.0
libtpu: 0.0.40
codegen_flags: <defaults>
</compile_context>

<pallas_src>
import jax
import jax.numpy as jnp
from jax.experimental import pallas as pl
from jax.experimental.pallas import tpu as pltpu

_TARGET_BLOCK_BYTES = 4 * 1024 * 1024  # safe with double-buffering on v7x (64 MiB VMEM)
_REV_SUPPORTED = None  # lazily probed: does lax.rev lower in this jax build?


def _hflip_rev_kernel(flags_ref, x_ref, o_ref):
    # flags_ref: SMEM int32 (B,)  -- scalar-prefetched flip decisions
    # x_ref/o_ref: VMEM (1, R, W) -- slab of rows of one sample
    flag = flags_ref[pl.program_id(0)]

    @pl.when(flag > 0)
    def _flip():
        o_ref[0] = jnp.flip(x_ref[0], axis=-1)  # XLU lane reversal

    @pl.when(flag == 0)
    def _copy():
        o_ref[...] = x_ref[...]  # plain VMEM copy, no compute


def _hflip_mxu_kernel(flags_ref, x_ref, j_ref, o_ref):
    # Fallback: flip via matmul with the anti-diagonal permutation J (W, W).
    # Permutation matmul is exact for float dtypes (each output element is a
    # single input element times 1.0).
    flag = flags_ref[pl.program_id(0)]

    @pl.when(flag > 0)
    def _flip():
        x = x_ref[0]  # (R, W)
        o_ref[0] = jnp.dot(
            x, j_ref[...], preferred_element_type=jnp.float32
        ).astype(o_ref.dtype)

    @pl.when(flag == 0)
    def _copy():
        o_ref[...] = x_ref[...]


def _rev_flip_supported() -> bool:
    """Probe (once) whether jnp.flip / lax.rev lowers inside a Pallas TPU kernel."""
    global _REV_SUPPORTED
    if _REV_SUPPORTED is None:
        def probe(x_ref, o_ref):
            o_ref[...] = jnp.flip(x_ref[...], axis=-1)
        try:
            xp = jnp.arange(16 * 16, dtype=jnp.float32).reshape(16, 16)
            out = pl.pallas_call(
                probe, out_shape=jax.ShapeDtypeStruct((16, 16), jnp.float32)
            )(xp)
            out = jax.block_until_ready(out)
            _REV_SUPPORTED = bool(jnp.array_equal(out, xp[:, ::-1]))
        except Exception:
            _REV_SUPPORTED = False
    return _REV_SUPPORTED


def _flip_selected(x, flags):
    """Flip x[b] along W wherever flags[b] != 0; x is (B, C, H, W)."""
    B, C, H, W = x.shape
    rows = C * H
    itemsize = jnp.dtype(x.dtype).itemsize

    # Fold C*H into the sublane axis; the flip is independent per row.
    x3 = x.reshape(B, rows, W)

    # Row-slab size: as large as the VMEM budget allows (big DMAs ~ HBM roofline).
    row_bytes = W * itemsize
    max_rows = max(1, _TARGET_BLOCK_BYTES // row_bytes)
    if max_rows >= rows:
        block_rows = rows  # whole sample per grid step
    else:
        # Partial blocks must keep the sublane dim a multiple of 8.
        block_rows = min(rows, max(8, (max_rows // 8) * 8))
    n_row_blocks = pl.cdiv(rows, block_rows)
    block_bytes = block_rows * row_bytes

    grid = (B, n_row_blocks)
    x_spec = pl.BlockSpec((1, block_rows, W), lambda b, r, fl: (b, r, 0))
    o_spec = pl.BlockSpec((1, block_rows, W), lambda b, r, fl: (b, r, 0))

    cost = pl.CostEstimate(
        flops=0,
        transcendentals=0,
        bytes_accessed=2 * B * rows * W * itemsize,
    )
    params = pltpu.CompilerParams(
        # Both axes independent -> megacore-shardable (v7x: 2 TensorCores).
        dimension_semantics=("parallel", "parallel"),
        # in + out double-buffered blocks plus headroom; <= 32 MiB is safe on
        # v5e/v6e (128 MiB VMEM) and v7x (64 MiB VMEM).
        vmem_limit_bytes=int(max(32 * 1024 * 1024, 6 * block_bytes)),
    )

    if _rev_flip_supported():
        out3 = pl.pallas_call(
            _hflip_rev_kernel,
            out_shape=jax.ShapeDtypeStruct(x3.shape, x3.dtype),
            grid_spec=pltpu.PrefetchScalarGridSpec(
                num_scalar_prefetch=1, grid=grid,
                in_specs=[x_spec], out_specs=o_spec),
            compiler_params=params,
            cost_estimate=cost,
        )(flags, x3)
    elif jnp.issubdtype(x.dtype, jnp.floating):
        # Anti-diagonal permutation: (x @ J)[..., w] = x[..., W - 1 - w].
        idx = jnp.arange(W)
        J = jnp.zeros((W, W), dtype=x.dtype).at[idx, W - 1 - idx].set(1)
        out3 = pl.pallas_call(
            _hflip_mxu_kernel,
            out_shape=jax.ShapeDtypeStruct(x3.shape, x3.dtype),
            grid_spec=pltpu.PrefetchScalarGridSpec(
                num_scalar_prefetch=1, grid=grid,
                in_specs=[x_spec,
                          pl.BlockSpec((W, W), lambda b, r, fl: (0, 0))],
                out_specs=o_spec),
            compiler_params=params,
            cost_estimate=cost,
        )(flags, x3, J)
    else:
        # TODO(synk): no lowering-safe in-kernel lane reversal for this
        # dtype on this jax build; fall back to plain XLA (still correct).
        out3 = jnp.where(flags[:, None, None].astype(bool),
                         jnp.flip(x3, axis=-1), x3)

    return out3.reshape(B, C, H, W)


def batch_random_horizontal_flip(x, key, p=0.5):
    """JAX/Pallas equivalent of BatchRandomHorizontalFlip.forward.

    x: (B, C, H, W) array. key: jax PRNG key (replaces torch.rand(B)).
    """
    B = x.shape[0]
    u = jax.random.uniform(key, (B,), dtype=jnp.float32)  # torch.rand(B)
    flags = (u <= p).astype(jnp.int32)
    return _flip_selected(x, flags)


if __name__ == "__main__":
    key = jax.random.PRNGKey(0)
    k_data, k_flip = jax.random.split(key)

    B, C, H, W = 2, 4, 16, 16
    x = jax.random.normal(k_data, (B, C, H, W), dtype=jnp.float32)

    out = batch_random_horizontal_flip(x, k_flip, p=0.5)
    out = jax.block_until_ready(out)

    # Pure-JAX reference with the same random decisions.
    u = jax.random.uniform(k_flip, (B,), dtype=jnp.float32)
    flags = u <= 0.5
    ref = jnp.where(flags[:, None, None, None], jnp.flip(x, axis=-1), x)

    assert out.shape == x.shape and out.dtype == x.dtype
    assert jnp.array_equal(out, ref), "mismatch vs reference"
    print("KERNEL_OK")
</pallas_src>

<mosaic_0001>
module attributes {stable_mosaic.version = 11 : i64} {
  func.func @_hflip_mxu_kernel(%arg0: i32, %arg1: i32, %arg2: memref<2xi32, #tpu.memory_space<smem>>, %arg3: memref<1x64x16xf32, #tpu.memory_space<vmem>>, %arg4: memref<16x16xf32, #tpu.memory_space<vmem>>, %arg5: memref<1x64x16xf32, #tpu.memory_space<vmem>>) attributes {dimension_semantics = [#tpu.dimension_semantics<parallel>, #tpu.dimension_semantics<parallel>], iteration_bounds = array<i64: 2, 1>, scalar_prefetch = 1 : i64, scratch_operands = 0 : i64, tpu.core_type = #tpu.core_type<tc>, window_params = [{transform_indices = @transform_0, window_bounds = array<i64: 1, 64, 16>}, {pipeline_mode = #tpu.pipeline_mode<synchronous>, transform_indices = @transform_1, window_bounds = array<i64: 16, 16>}, {transform_indices = @transform_2, window_bounds = array<i64: 1, 64, 16>}]} {
    %0 = arith.index_cast %arg0 : i32 to index
    %1 = memref.load %arg2[%0] : memref<2xi32, #tpu.memory_space<smem>>
    %c0_i32 = arith.constant 0 : i32
    %2 = arith.cmpi sgt, %1, %c0_i32 : i32
    %3 = arith.extui %2 : i1 to i32
    %c0_i32_0 = arith.constant 0 : i32
    %4 = arith.cmpi ne, %3, %c0_i32_0 : i32
    scf.if %4 {
      %c0 = arith.constant 0 : index
      %c0_3 = arith.constant 0 : index
      %c0_4 = arith.constant 0 : index
      %8 = vector.load %arg3[%c0, %c0_3, %c0_4] : memref<1x64x16xf32, #tpu.memory_space<vmem>>, vector<1x64x16xf32>
      %9 = vector.shape_cast %8 : vector<1x64x16xf32> to vector<64x16xf32>
      %c0_5 = arith.constant 0 : index
      %c0_6 = arith.constant 0 : index
      %10 = vector.load %arg4[%c0_5, %c0_6] : memref<16x16xf32, #tpu.memory_space<vmem>>, vector<16x16xf32>
      %cst = arith.constant dense<0.000000e+00> : vector<64x16xf32>
      %11 = tpu.matmul %9, %10, %cst {dimension_numbers = #tpu.dot_dimension_numbers<[1], [0], [0], [1], [0, 0, 1, 1], [], []>} : vector<64x16xf32>, vector<16x16xf32>, vector<64x16xf32> -> vector<64x16xf32>
      %c0_7 = arith.constant 0 : index
      %c0_8 = arith.constant 0 : index
      %c0_9 = arith.constant 0 : index
      %12 = vector.load %arg5[%c0_7, %c0_8, %c0_9] : memref<1x64x16xf32, #tpu.memory_space<vmem>>, vector<1x64x16xf32>
      %13 = vector.shape_cast %12 : vector<1x64x16xf32> to vector<64x16xf32>
      %14 = vector.shape_cast %11 : vector<64x16xf32> to vector<1x64x16xf32>
      tpu.vector_store %arg5[%c0_7, %c0_8, %c0_9], %14 {strides = array<i32>} : memref<1x64x16xf32, #tpu.memory_space<vmem>>, vector<1x64x16xf32>,
    } else {
    }
    %c0_i32_1 = arith.constant 0 : i32
    %5 = arith.cmpi eq, %1, %c0_i32_1 : i32
    %6 = arith.extui %5 : i1 to i32
    %c0_i32_2 = arith.constant 0 : i32
    %7 = arith.cmpi ne, %6, %c0_i32_2 : i32
    scf.if %7 {
      %c0 = arith.constant 0 : index
      %c0_3 = arith.constant 0 : index
      %c0_4 = arith.constant 0 : index
      %8 = vector.load %arg3[%c0, %c0_3, %c0_4] : memref<1x64x16xf32, #tpu.memory_space<vmem>>, vector<1x64x16xf32>
      %c0_5 = arith.constant 0 : index
      %c0_6 = arith.constant 0 : index
      %c0_7 = arith.constant 0 : index
      %9 = vector.load %arg5[%c0_5, %c0_6, %c0_7] : memref<1x64x16xf32, #tpu.memory_space<vmem>>, vector<1x64x16xf32>
      tpu.vector_store %arg5[%c0_5, %c0_6, %c0_7], %8 {strides = array<i32>} : memref<1x64x16xf32, #tpu.memory_space<vmem>>, vector<1x64x16xf32>,
    } else {
    }
    return
  }
  func.func @transform_0(%arg0: i32, %arg1: i32, %arg2: memref<2xi32, #tpu.memory_space<smem>>) -> (i32, i32, i32) {
    %c0_i32 = arith.constant 0 : i32
    %c0_i32_0 = arith.constant 0 : i32
    return %arg0, %arg1, %c0_i32 : i32, i32, i32
  }
  func.func @transform_1(%arg0: i32, %arg1: i32, %arg2: memref<2xi32, #tpu.memory_space<smem>>) -> (i32, i32) {
    %c0_i32 = arith.constant 0 : i32
    %c0_i32_0 = arith.constant 0 : i32
    %c0_i32_1 = arith.constant 0 : i32
    return %c0_i32, %c0_i32_0 : i32, i32
  }
  func.func @transform_2(%arg0: i32, %arg1: i32, %arg2: memref<2xi32, #tpu.memory_space<smem>>) -> (i32, i32, i32) {
    %c0_i32 = arith.constant 0 : i32
    %c0_i32_0 = arith.constant 0 : i32
    return %arg0, %arg1, %c0_i32 : i32, i32, i32
  }
}

</mosaic_0001>

<llo_original>
// kernel: tpu_custom_call.1
$region0: #{tpu_custom_call.1}
  #allocation0 [shape = 'u32[]', space=smem, size = 0x4, offset = 0x4, fixed_abs, tag = 'smem constant byte address 0x4 - core index']
  #allocation1 [shape = 'u32[72,128]{1,0:T(1,128)}', space=vmem, size = 0x9000, scoped, tag = 'internal scratch']
  #allocation2 [shape = 's32[1]{0}', space=sflag, size = 0x4, scoped, tag = 'scoped memory for tpu_custom_call.1']
  #allocation3 [shape = 'u8[512]{0}', space=smem, size = 0x200, scoped, tag = 'prefetched SMEM operand 0']
  %s0 = inlined_call_operand.vmem [shape: s32[2], index: 0, kind: input, shape index: {}]
  %s1 = inlined_call_operand.vmem [shape: f32[2,64,16], index: 1, kind: input, shape index: {}]
  %s2 = inlined_call_operand.vmem [shape: f32[16,16], index: 2, kind: input, shape index: {}]
  %s3 = inlined_call_operand.vmem [shape: f32[2,64,16], index: 3, kind: output, shape index: {}]
  %s4 = sld [smem:[#allocation0]]
  $region49: #{tpu_custom_call.1} parent=0
    _
  %s6 = ssub.s32 1, %s4
  %s7 = scalar_select 0, %s6, %s4
  %s9 = sshll.u32 %s0, 4
  %s10 = int_to_ptr.vmem [resolvable:$true] %s9
  %12 = dma.vmem_to_smem %s10, 16, [#allocation3], [#allocation2]
  %14 = dma.done [#allocation2], 16
  %15 = sfence
  loop: start=0, step=1, limit=4
  $region2: #{tpu_custom_call.1} parent=0 // loop_pre_header
    _
  $region3: #{tpu_custom_call.1} parent=0 // loop_header
    %s17 = sphi 0, %s21
    %p18 = scmp.ge.s32.totalorder %s17, 4
    %s24 = sphi 0, %s36
    %s25 = sphi 0, %s32
    %s26 = sphi 0, %s24
    %s27 = sphi 0, %s25
    %s28 = sphi 0, %s26
    %s29 = sphi 0, %s27
    %s41 = sphi 0, %s43
    %s44 = sphi 0, %s41
    %s45 = sphi 0, %s44
    %s61 = sphi 0, %s45
    %s65 = sphi 0, %s65
    %s67 = sphi 0, %s65
    %s68 = sphi 0, %s67
    %s82 = sphi 0, %s68
    %s90 = sphi 0, %s92
    %s93 = sphi 0, %s90
    %s94 = sphi 0, %s93
    %s110 = sphi 0, %s94
  $region4: #{tpu_custom_call.1} parent=0 // loop_header_branch
    %20 = sbr.rel (%p18) target = $region8
  $region5: #{tpu_custom_call.1} parent=0 // loop_body
    %s22 = ssub.s32 %s17, 1
    %s23 = ssub.s32 %s17, 2
    %s30 = sadd.s32 1, %s25
    %p31 = scmp.ge.s32.totalorder %s30, 1
    %s32 = scalar_select %p31, 0, %s30
    %s33 = sadd.s32 1, %s24
    %s34 = scalar_select %p31, %s33, %s24
    %p35 = scmp.ge.s32.totalorder %s34, 2
    %s36 = scalar_select %p35, 0, %s34
    %s37 = ssub.s32 %s24, %s36
    %s38 = ssub.s32 %s25, %s32
    %s39 = sor.u32 %s37, %s38
    %p40 = scmp.eq.s32.totalorder %s39, 0
    %s42 = sadd.s32 %s41, 1
    %s43 = scalar_select %p40, %s41, %s42
    %p46 = pneg %p40
    %p47 = scmp.eq.s32.totalorder %s17, 1
    %p48 = por %p46, %p47
    %p49 = scmp.ne.s32.totalorder %s41, %s44
    %p50 = scmp.eq.s32.totalorder %s17, 0
    %p51 = por %p49, %p50
    %p52 = scmp.ne.s32.totalorder %s41, %s44
    %p53 = scmp.eq.s32.totalorder %s22, 1
    %p54 = por %p52, %p53
    %p55 = scmp.ne.s32.totalorder %s44, %s45
    %p56 = scmp.eq.s32.totalorder %s22, 0
    %p57 = por %p55, %p56
    %p58 = scmp.ne.s32.totalorder %s44, %s45
    %p59 = scmp.eq.s32.totalorder %s23, 1
    %p60 = por %p58, %p59
    %p62 = scmp.ne.s32.totalorder %s45, %s61
    %p63 = scmp.eq.s32.totalorder %s23, 0
    %p64 = por %p62, %p63
    %s66 = sadd.s32 %s65, 1
    %p69 = scmp.eq.s32.totalorder %s17, 1
    %p70 = scmp.ne.s32.totalorder %s65, %s67
    %p71 = scmp.eq.s32.totalorder %s17, 0
    %p72 = por %p70, %p71
    %p73 = scmp.ne.s32.totalorder %s65, %s67
    %p74 = scmp.eq.s32.totalorder %s22, 1
    %p75 = por %p73, %p74
    %p76 = scmp.ne.s32.totalorder %s67, %s68
    %p77 = scmp.eq.s32.totalorder %s22, 0
    %p78 = por %p76, %p77
    %p79 = scmp.ne.s32.totalorder %s67, %s68
    %p80 = scmp.eq.s32.totalorder %s23, 1
    %p81 = por %p79, %p80
    %p83 = scmp.ne.s32.totalorder %s68, %s82
    %p84 = scmp.eq.s32.totalorder %s23, 0
    %p85 = por %p83, %p84
    %s86 = ssub.s32 %s24, %s36
    %s87 = ssub.s32 %s25, %s32
    %s88 = sor.u32 %s86, %s87
    %p89 = scmp.eq.s32.totalorder %s88, 0
    %s91 = sadd.s32 %s90, 1
    %s92 = scalar_select %p89, %s90, %s91
    %p95 = pneg %p89
    %p96 = scmp.eq.s32.totalorder %s17, 1
    %p97 = por %p95, %p96
    %p98 = scmp.ne.s32.totalorder %s90, %s93
    %p99 = scmp.eq.s32.totalorder %s17, 0
    %p100 = por %p98, %p99
    %p101 = scmp.ne.s32.totalorder %s90, %s93
    %p102 = scmp.eq.s32.totalorder %s22, 1
    %p103 = por %p101, %p102
    %p104 = scmp.ne.s32.totalorder %s93, %s94
    %p105 = scmp.eq.s32.totalorder %s22, 0
    %p106 = por %p104, %p105
    %p107 = scmp.ne.s32.totalorder %s93, %s94
    %p108 = scmp.eq.s32.totalorder %s23, 1
    %p109 = por %p107, %p108
    %p111 = scmp.ne.s32.totalorder %s94, %s110
    %p112 = scmp.eq.s32.totalorder %s23, 0
    %p113 = por %p111, %p112
    %p114 = scmp.le.s32.totalorder 1, %s17
    %p115 = scmp.lt.s32.totalorder %s17, 3
    %p116 = pnand %p114, %p115
    %p117 = pneg %p116
    // Predicated region
    $region9: #{tpu_custom_call.1} parent=5 // pred_check
      _
    $region10: #{tpu_custom_call.1} parent=5 // pred_check_branch
      %119 = sbr.rel (%p116) target = $region12
    $region11: #{tpu_custom_call.1} parent=5 // pred_region
      %s120 = ssub.s32 %s17, 1
      // Predicated region
      $region13: #{tpu_custom_call.1} parent=11 // pred_check
        %p121 = pneg %p78
      $region14: #{tpu_custom_call.1} parent=11 // pred_check_branch
        %123 = sbr.rel (%p121) target = $region16
      $region15: #{tpu_custom_call.1} parent=11 // pred_region
        _
      $region16: #{tpu_custom_call.1} parent=11 // pred_fallthru
        _
    $region12: #{tpu_custom_call.1} parent=5 // pred_fallthru
      _
    %p124 = scmp.lt.s32.totalorder %s17, 2
    // Predicated region
    $region17: #{tpu_custom_call.1} parent=5 // pred_check
      %p125 = pneg %p124
    $region18: #{tpu_custom_call.1} parent=5 // pred_check_branch
      %127 = sbr.rel (%p125) target = $region20
    $region19: #{tpu_custom_call.1} parent=5 // pred_region
      // Predicated region
      $region21: #{tpu_custom_call.1} parent=19 // pred_check
        %p128 = pneg %p51
      $region22: #{tpu_custom_call.1} parent=19 // pred_check_branch
        %130 = sbr.rel (%p128) target = $region24
      $region23: #{tpu_custom_call.1} parent=19 // pred_region
        %s131 = smul.u32 8, %s25
        %p132 = scmp.lt.s32.totalorder %s24, 1
        %s133 = scalar_select %p132, %s24, 1
        %p134 = scmp.lt.s32.totalorder %s131, 7
        %s135 = scalar_select %p134, %s131, 7
        %s136 = smul.addr %s133, 8
        %s137 = sadd.s32 %s135, %s136
        %s138 = smul.addr %s137, 8
        %s139 = scalar_lea.vmem %s1, %s138
        %s140 = smul.u32 8, %s25
      $region24: #{tpu_custom_call.1} parent=19 // pred_fallthru
        _
    $region20: #{tpu_custom_call.1} parent=5 // pred_fallthru
      _
    %p141 = scmp.le.s32.totalorder 1, %s17
    %p142 = scmp.lt.s32.totalorder %s17, 3
    %p143 = pnand %p141, %p142
    %p144 = pneg %p143
    // Predicated region
    $region25: #{tpu_custom_call.1} parent=5 // pred_check
      _
    $region26: #{tpu_custom_call.1} parent=5 // pred_check_branch
      %146 = sbr.rel (%p143) target = $region28
    $region27: #{tpu_custom_call.1} parent=5 // pred_region
      %s147 = ssub.s32 %s17, 1
      %s148 = smul.u32 8, %s27
      %p149 = scmp.lt.s32.totalorder %s26, 1
      %s150 = scalar_select %p149, %s26, 1
      %p151 = scmp.lt.s32.totalorder %s148, 7
      %s152 = scalar_select %p151, %s148, 7
      %s153 = smul.addr %s150, 8
      %s154 = sadd.s32 %s152, %s153
      %s155 = smul.addr %s154, 8
      %s156 = scalar_lea.vmem %s1, %s155
      %p157 = pneg %p57
      %p158 = pneg %p54
      %p159 = pneg %p78
      %p160 = pneg %p75
      %p161 = pneg %p106
      %p162 = pneg %p103
      %s163 = smul.u32 8, %s27
      %p164 = scmp.lt.s32.totalorder %s26, 1
      %s165 = scalar_select %p164, %s26, 1
      %p166 = scmp.lt.s32.totalorder %s163, 7
      %s167 = scalar_select %p166, %s163, 7
      %s168 = smul.addr %s165, 8
      %s169 = sadd.s32 %s167, %s168
      %s170 = smul.addr %s169, 8
      %s171 = scalar_lea.vmem %s3, %s170
      %s172 = smul.u32 8, %s27
      %p173 = scmp.lt.s32.totalorder %s26, 1
      %s174 = scalar_select %p173, %s26, 1
      %p175 = scmp.lt.s32.totalorder %s172, 7
      %s176 = scalar_select %p175, %s172, 7
      %s177 = smul.addr %s174, 8
      %s178 = sadd.s32 %s176, %s177
      %s179 = smul.addr %s178, 8
      %s180 = scalar_lea.vmem %s1, %s179
      %s181 = smul.u32 8, %s27
      %s182 = smul.u32 8, %s27
      %p183 = scmp.lt.s32.totalorder %s26, 1
      %s184 = scalar_select %p183, %s26, 1
      %p185 = scmp.lt.s32.totalorder %s182, 7
      %s186 = scalar_select %p185, %s182, 7
      %s187 = smul.addr %s184, 8
      %s188 = sadd.s32 %s186, %s187
      %s189 = smul.addr %s188, 8
      %s190 = scalar_lea.vmem %s3, %s189
      %s191 = smul.u32 8, %s27
      %s192 = sld [smem:[#allocation3 + %s26]]
      %p193 = scmp.gt.s32.totalorder %s192, 0
      // Predicated region
      $region29: #{tpu_custom_call.1} parent=27 // pred_check
        %p194 = pneg %p193
      $region30: #{tpu_custom_call.1} parent=27 // pred_check_branch
        %196 = sbr.rel (%p194) target = $region32
      $region31: #{tpu_custom_call.1} parent=27 // pred_region
        %v197 = vld [vmem:[%s180] sm:$0xff]
        %v198 = vld [vmem:[%s180 + $0x8] sm:$0xff]
        %v199 = vld [vmem:[%s180 + $0x10] sm:$0xff]
        %v200 = vld [vmem:[%s180 + $0x18] sm:$0xff]
        %v201 = vld [vmem:[%s180 + $0x20] sm:$0xff]
        %v202 = vld [vmem:[%s180 + $0x28] sm:$0xff]
        %v203 = vld [vmem:[%s180 + $0x30] sm:$0xff]
        %v204 = vld [vmem:[%s180 + $0x38] sm:$0xff]
        %v205 = vld [vmem:[%s2] sm:$0xff]
        %v206 = vld [vmem:[%s2 + $0x8] sm:$0xff]
        %vm207 = vcmask 130048
        %v209 = vsel %vm207, %v197, 0
        %v212 = vsel %vm207, %v198, 0
        %v215 = vsel %vm207, %v199, 0
        %v218 = vsel %vm207, %v200, 0
        %v221 = vsel %vm207, %v201, 0
        %v224 = vsel %vm207, %v202, 0
        %v227 = vsel %vm207, %v203, 0
        %v230 = vsel %vm207, %v204, 0
        %232 = vmatpush.msra.mxu0 0.0
        %233 = vmatpush.msra.mxu0 0.0
        %234 = vmatpush.msra.mxu0 0.0
        %235 = vmatpush.msra.mxu0 0.0
        %236 = vmatpush.msra.mxu0 0.0
        %237 = vmatpush.msra.mxu0 0.0
        %238 = vmatpush.msra.mxu0 0.0
        %239 = vmatpush.msra.mxu0 0.0
        %240 = vmatpush.msra.mxu0 0.0
        %241 = vmatpush.msra.mxu0 0.0
        %242 = vmatpush.msra.mxu0 0.0
        %243 = vmatpush.msra.mxu0 0.0
        %244 = vmatpush.msra.mxu0 0.0
        %245 = vmatpush.msra.mxu0 0.0
        %246 = vmatpush.msra.mxu0 %v206
        %247 = vmatpush.msra.mxu0 %v205
        %248 = vmatmul.f32.gmra.mxu0 %v209
        %v249 = vpop.f32.mrf.mxu0
        %v250 = vadd.f32 0.0, %v249
        %251 = vmatmul.f32.gmra.mxu0 %v212
        %v252 = vpop.f32.mrf.mxu0
        %v253 = vadd.f32 0.0, %v252
        %254 = vmatmul.f32.gmra.mxu0 %v215
        %v255 = vpop.f32.mrf.mxu0
        %v256 = vadd.f32 0.0, %v255
        %257 = vmatmul.f32.gmra.mxu0 %v218
        %v258 = vpop.f32.mrf.mxu0
        %v259 = vadd.f32 0.0, %v258
        %260 = vmatmul.f32.gmra.mxu0 %v221
        %v261 = vpop.f32.mrf.mxu0
        %v262 = vadd.f32 0.0, %v261
        %263 = vmatmul.f32.gmra.mxu0 %v224
        %v264 = vpop.f32.mrf.mxu0
        %v265 = vadd.f32 0.0, %v264
        %266 = vmatmul.f32.gmra.mxu0 %v227
        %v267 = vpop.f32.mrf.mxu0
        %v268 = vadd.f32 0.0, %v267
        %269 = vmatmul.f32.gmra.mxu0 %v230
        %v270 = vpop.f32.mrf.mxu0
        %v271 = vadd.f32 0.0, %v270
        %272 = vdwg.mxu0
        %273 = vst.msk [vmem:[%s190] sm:$0xff] %vm207, %v250
        %274 = vst.msk [vmem:[%s190 + $0x8] sm:$0xff] %vm207, %v253
        %275 = vst.msk [vmem:[%s190 + $0x10] sm:$0xff] %vm207, %v256
        %276 = vst.msk [vmem:[%s190 + $0x18] sm:$0xff] %vm207, %v259
        %277 = vst.msk [vmem:[%s190 + $0x20] sm:$0xff] %vm207, %v262
        %278 = vst.msk [vmem:[%s190 + $0x28] sm:$0xff] %vm207, %v265
        %279 = vst.msk [vmem:[%s190 + $0x30] sm:$0xff] %vm207, %v268
        %280 = vst.msk [vmem:[%s190 + $0x38] sm:$0xff] %vm207, %v271
      $region32: #{tpu_custom_call.1} parent=27 // pred_fallthru
        _
      %p281 = scmp.eq.s32.totalorder %s192, 0
      // Predicated region
      $region33: #{tpu_custom_call.1} parent=27 // pred_check
        %p282 = pneg %p281
      $region34: #{tpu_custom_call.1} parent=27 // pred_check_branch
        %284 = sbr.rel (%p282) target = $region36
      $region35: #{tpu_custom_call.1} parent=27 // pred_region
        %v285 = vld [vmem:[%s180] sm:$0xff]
        %v286 = vld [vmem:[%s180 + $0x8] sm:$0xff]
        %v287 = vld [vmem:[%s180 + $0x10] sm:$0xff]
        %v288 = vld [vmem:[%s180 + $0x18] sm:$0xff]
        %v289 = vld [vmem:[%s180 + $0x20] sm:$0xff]
        %v290 = vld [vmem:[%s180 + $0x28] sm:$0xff]
        %v291 = vld [vmem:[%s180 + $0x30] sm:$0xff]
        %v292 = vld [vmem:[%s180 + $0x38] sm:$0xff]
        %vm293 = vcmask 130048
        %294 = vst.msk [vmem:[%s190] sm:$0xff] %vm293, %v285
        %295 = vst.msk [vmem:[%s190 + $0x8] sm:$0xff] %vm293, %v286
        %296 = vst.msk [vmem:[%s190 + $0x10] sm:$0xff] %vm293, %v287
        %297 = vst.msk [vmem:[%s190 + $0x18] sm:$0xff] %vm293, %v288
        %298 = vst.msk [vmem:[%s190 + $0x20] sm:$0xff] %vm293, %v289
        %299 = vst.msk [vmem:[%s190 + $0x28] sm:$0xff] %vm293, %v290
        %300 = vst.msk [vmem:[%s190 + $0x30] sm:$0xff] %vm293, %v291
        %301 = vst.msk [vmem:[%s190 + $0x38] sm:$0xff] %vm293, %v292
      $region36: #{tpu_custom_call.1} parent=27 // pred_fallthru
        _
      %s302 = smul.u32 8, %s27
      %p303 = scmp.lt.s32.totalorder %s26, 1
      %s304 = scalar_select %p303, %s26, 1
      %p305 = scmp.lt.s32.totalorder %s302, 7
      %s306 = scalar_select %p305, %s302, 7
      %s307 = smul.addr %s304, 8
      %s308 = sadd.s32 %s306, %s307
      %s309 = smul.addr %s308, 8
      %s310 = scalar_lea.vmem %s3, %s309
      // Predicated region
      $region37: #{tpu_custom_call.1} parent=27 // pred_check
        %p311 = pneg %p103
      $region38: #{tpu_custom_call.1} parent=27 // pred_check_branch
        %313 = sbr.rel (%p311) target = $region40
      $region39: #{tpu_custom_call.1} parent=27 // pred_region
        %s314 = smul.u32 8, %s27
      $region40: #{tpu_custom_call.1} parent=27 // pred_fallthru
        _
    $region28: #{tpu_custom_call.1} parent=5 // pred_fallthru
      _
    %p315 = scmp.le.s32.totalorder 2, %s17
    // Predicated region
    $region41: #{tpu_custom_call.1} parent=5 // pred_check
      %p316 = pneg %p315
    $region42: #{tpu_custom_call.1} parent=5 // pred_check_branch
      %318 = sbr.rel (%p316) target = $region44
    $region43: #{tpu_custom_call.1} parent=5 // pred_region
      %s319 = ssub.s32 %s17, 2
      // Predicated region
      $region45: #{tpu_custom_call.1} parent=43 // pred_check
        %p320 = pneg %p109
      $region46: #{tpu_custom_call.1} parent=43 // pred_check_branch
        %322 = sbr.rel (%p320) target = $region48
      $region47: #{tpu_custom_call.1} parent=43 // pred_region
        %s323 = smul.u32 8, %s29
        %p324 = scmp.lt.s32.totalorder %s28, 1
        %s325 = scalar_select %p324, %s28, 1
        %p326 = scmp.lt.s32.totalorder %s323, 7
        %s327 = scalar_select %p326, %s323, 7
        %s328 = smul.addr %s325, 8
        %s329 = sadd.s32 %s327, %s328
        %s330 = smul.addr %s329, 8
        %s331 = scalar_lea.vmem %s3, %s330
      $region48: #{tpu_custom_call.1} parent=43 // pred_fallthru
        _
    $region44: #{tpu_custom_call.1} parent=5 // pred_fallthru
      _
  $region6: #{tpu_custom_call.1} parent=0 // loop_footer
    %s21 = sadd.s32 1, %s17
  $region7: #{tpu_custom_call.1} parent=0 // loop_footer_branch
    %16 = sbr.rel target = $region3
  $region8: #{tpu_custom_call.1} parent=0 // loop_exit
    _

</llo_original>
